<compile_context>
chip_gen: v7x
topology: tpu7x:2x2x1
jax: 0.10.0
libtpu: 0.0.40
codegen_flags: <defaults>
</compile_context>

<pallas_src>
import functools

import jax
import jax.numpy as jnp
import numpy as np
from jax.experimental import pallas as pl
from jax.experimental.pallas import tpu as pltpu

# ---- small synthetic shapes consistent with the module ----
B = 2            # batch
T = 8            # num_segments (time_steps)
C = 3            # RGB channels per frame
H = W = 16       # spatial
FEAT = 2048      # resnet101 fc.in_features (feature_dim in _prepare_fc)
NUM_CLASS = 10

LANE = 128
_MAX_B_BLK = 128   # fixed batch tile for large B (keeps per-block VMEM at a few MiB)


def _round_up(x, m):
    return ((x + m - 1) // m) * m


def tsn_sof_kernel(x_ref, w_ref, b_ref, o_ref):
    """Fused per-grid-step kernel: spatial sum -> folded MXU matmul -> bias.

    x_ref: (b_blk, T*C, H*W)   frames for b_blk batch elements (row = t*C + c)
    w_ref: (T*C, Cpad)         folded weight, row t*C+c == (stem_w@fc_w)[c] / (H*W*T)
    b_ref: (1, Cpad)           new_fc bias (class-dim padded)
    o_ref: (b_blk, Cpad)
    """
    # spatial global-sum: lane-axis reduce on full (24, 256) tiles (XLU slot)
    pooled = jnp.sum(x_ref[...], axis=-1)                     # (b_blk, T*C)
    # folded linear + segment mean in one MXU contraction (scales folded into w)
    out = jnp.dot(pooled, w_ref[...],
                  preferred_element_type=jnp.float32)         # (b_blk, Cpad)
    o_ref[...] = out + b_ref[...]                              # broadcast (1, Cpad)


def tsn_sof_forward(x_btchw, stem_w, fc_w, fc_b, *, num_segments=T):
    """x_btchw: (B, T*C, H, W) like the PyTorch input. Reshapes/folding live here."""
    b, tc, h, w = x_btchw.shape
    t = num_segments
    c = tc // t
    assert c * t == tc

    x = x_btchw.reshape(b, tc, h * w).astype(jnp.float32)      # (B, T*C, H*W)

    # TODO(synk): the ResNet-101 trunk has no clean Pallas equivalent; it is replaced
    # by a deterministic linear stem (stem_w). Because stem, new_fc, the avg pool and
    # the avg consensus are all linear, stem_w @ fc_w and the constant 1/(H*W*T)
    # scale are folded once here (exact up to fp reassociation).
    w_comb = jnp.dot(stem_w, fc_w, precision=jax.lax.Precision.HIGHEST)  # (C, n_class)
    n_class = w_comb.shape[-1]
    n_pad = _round_up(max(n_class, LANE), LANE)                # lane-dense class dim

    scale = 1.0 / float(h * w * t)                             # avg pool * avg consensus
    w_tiled = jnp.tile(w_comb, (t, 1)) * scale                 # (T*C, n_class), row = t*C+c
    w_tiled = jnp.pad(w_tiled, ((0, 0), (0, n_pad - n_class))).astype(jnp.float32)
    bias = jnp.pad(fc_b.reshape(1, n_class),
                   ((0, 0), (0, n_pad - n_class))).astype(jnp.float32)

    # Grid policy: one step for small B (single-TC v5e/v6e pay ~0.35us per extra
    # step for no gain); fixed-size batch tiles once B grows (bounded VMEM on v7x,
    # "parallel" axis shards across its two TensorCores).
    if b <= _MAX_B_BLK:
        b_blk = b
        b_pad = b
    else:
        b_blk = _MAX_B_BLK
        b_pad = _round_up(b, b_blk)
    if b_pad != b:
        x = jnp.pad(x, ((0, b_pad - b), (0, 0), (0, 0)))
    g = b_pad // b_blk

    out = pl.pallas_call(
        tsn_sof_kernel,
        out_shape=jax.ShapeDtypeStruct((b_pad, n_pad), jnp.float32),
        grid_spec=pltpu.PrefetchScalarGridSpec(
            num_scalar_prefetch=0,
            grid=(g,),
            in_specs=[
                pl.BlockSpec((b_blk, tc, h * w), lambda i: (i, 0, 0)),  # frames
                pl.BlockSpec((tc, n_pad), lambda i: (0, 0)),            # folded weight
                pl.BlockSpec((1, n_pad), lambda i: (0, 0)),             # new_fc bias
            ],
            out_specs=pl.BlockSpec((b_blk, n_pad), lambda i: (i, 0)),
        ),
        compiler_params=pltpu.CompilerParams(
            dimension_semantics=("parallel",)),
    )(x, w_tiled, bias)

    # output.squeeze(1) in the PyTorch forward is a no-op on (B, num_class); here we
    # just drop the batch/class padding.
    return out[:b, :n_class]


def reference_forward(x_btchw, stem_w, fc_w, fc_b, *, num_segments=T):
    """Pure-JAX reference mirroring the PyTorch graph (with the same stem stand-in)."""
    b, tc, h, w = x_btchw.shape
    t = num_segments
    frames = x_btchw.reshape(b * t, tc // t, h, w)
    pooled = frames.mean(axis=(2, 3))                                        # (B*T, C)
    feat = jnp.dot(pooled, stem_w, precision=jax.lax.Precision.HIGHEST)      # (B*T, FEAT)
    base_out = jnp.dot(feat, fc_w, precision=jax.lax.Precision.HIGHEST) + fc_b
    base_out = base_out.reshape(b, t, -1)                                    # view(B,T,num_class)
    return base_out.mean(axis=1)                                             # torch.mean(dim=1)


if __name__ == "__main__":
    key = jax.random.PRNGKey(0)
    k_x, k_stem, k_fc = jax.random.split(key, 3)

    # deterministic inputs / parameters
    x = jax.random.normal(k_x, (B, T * C, H, W), dtype=jnp.float32)
    stem_w = 0.5 * jax.random.normal(k_stem, (C, FEAT), dtype=jnp.float32)        # stand-in trunk
    fc_w = 0.001 * jax.random.normal(k_fc, (FEAT, NUM_CLASS), dtype=jnp.float32)  # normal_(w,0,0.001)
    fc_b = jnp.zeros((NUM_CLASS,), dtype=jnp.float32)                             # constant_(b,0)

    out = jax.block_until_ready(tsn_sof_forward(x, stem_w, fc_w, fc_b))
    ref = jax.block_until_ready(reference_forward(x, stem_w, fc_w, fc_b))

    # fold/reassociation error is ~1e-5 relative at these magnitudes; keep a tight bound
    np.testing.assert_allclose(np.asarray(out), np.asarray(ref), rtol=1e-3, atol=1e-6)
    assert out.shape == (B, NUM_CLASS)

    print("KERNEL_OK")
</pallas_src>

<mosaic_0001>
module attributes {stable_mosaic.version = 11 : i64} {
  func.func @tsn_sof_kernel(%arg0: i32, %arg1: memref<2x24x256xf32, #tpu.memory_space<vmem>>, %arg2: memref<24x128xf32, #tpu.memory_space<vmem>>, %arg3: memref<1x128xf32, #tpu.memory_space<vmem>>, %arg4: memref<2x128xf32, #tpu.memory_space<vmem>>) attributes {dimension_semantics = [#tpu.dimension_semantics<parallel>], iteration_bounds = array<i64: 1>, scalar_prefetch = 0 : i64, scratch_operands = 0 : i64, tpu.core_type = #tpu.core_type<tc>, window_params = [{transform_indices = @transform_0, window_bounds = array<i64: 2, 24, 256>}, {pipeline_mode = #tpu.pipeline_mode<synchronous>, transform_indices = @transform_1, window_bounds = array<i64: 24, 128>}, {pipeline_mode = #tpu.pipeline_mode<synchronous>, transform_indices = @transform_2, window_bounds = array<i64: 1, 128>}, {transform_indices = @transform_3, window_bounds = array<i64: 2, 128>}]} {
    %c0 = arith.constant 0 : index
    %c0_0 = arith.constant 0 : index
    %c0_1 = arith.constant 0 : index
    %0 = vector.load %arg1[%c0, %c0_0, %c0_1] : memref<2x24x256xf32, #tpu.memory_space<vmem>>, vector<2x24x256xf32>
    %cst = arith.constant dense<0.000000e+00> : vector<2x24xf32>
    %1 = vector.multi_reduction <add>, %0, %cst [2] : vector<2x24x256xf32> to vector<2x24xf32>
    %c0_2 = arith.constant 0 : index
    %c0_3 = arith.constant 0 : index
    %2 = vector.load %arg2[%c0_2, %c0_3] : memref<24x128xf32, #tpu.memory_space<vmem>>, vector<24x128xf32>
    %cst_4 = arith.constant dense<0.000000e+00> : vector<2x128xf32>
    %3 = tpu.matmul %1, %2, %cst_4 {dimension_numbers = #tpu.dot_dimension_numbers<[1], [0], [0], [1], [0, 0, 1, 1], [], []>} : vector<2x24xf32>, vector<24x128xf32>, vector<2x128xf32> -> vector<2x128xf32>
    %c0_5 = arith.constant 0 : index
    %c0_6 = arith.constant 0 : index
    %4 = vector.load %arg3[%c0_5, %c0_6] : memref<1x128xf32, #tpu.memory_space<vmem>>, vector<1x128xf32>
    %5 = vector.broadcast %4 : vector<1x128xf32> to vector<2x128xf32>
    %6 = arith.addf %3, %5 : vector<2x128xf32>
    %c0_7 = arith.constant 0 : index
    %c0_8 = arith.constant 0 : index
    %7 = vector.load %arg4[%c0_7, %c0_8] : memref<2x128xf32, #tpu.memory_space<vmem>>, vector<2x128xf32>
    tpu.vector_store %arg4[%c0_7, %c0_8], %6 {strides = array<i32>} : memref<2x128xf32, #tpu.memory_space<vmem>>, vector<2x128xf32>,
    return
  }
  func.func @transform_0(%arg0: i32) -> (i32, i32, i32) {
    %c0_i32 = arith.constant 0 : i32
    %c0_i32_0 = arith.constant 0 : i32
    %c0_i32_1 = arith.constant 0 : i32
    return %arg0, %c0_i32, %c0_i32_0 : i32, i32, i32
  }
  func.func @transform_1(%arg0: i32) -> (i32, i32) {
    %c0_i32 = arith.constant 0 : i32
    %c0_i32_0 = arith.constant 0 : i32
    %c0_i32_1 = arith.constant 0 : i32
    return %c0_i32, %c0_i32_0 : i32, i32
  }
  func.func @transform_2(%arg0: i32) -> (i32, i32) {
    %c0_i32 = arith.constant 0 : i32
    %c0_i32_0 = arith.constant 0 : i32
    %c0_i32_1 = arith.constant 0 : i32
    return %c0_i32, %c0_i32_0 : i32, i32
  }
  func.func @transform_3(%arg0: i32) -> (i32, i32) {
    %c0_i32 = arith.constant 0 : i32
    %c0_i32_0 = arith.constant 0 : i32
    return %arg0, %c0_i32 : i32, i32
  }
}

</mosaic_0001>

<llo_original>
// kernel: tpu_custom_call.1
$region0: #{tpu_custom_call.1}
  #allocation0 [shape = 'u32[]', space=smem, size = 0x4, offset = 0x4, fixed_abs, tag = 'smem constant byte address 0x4 - core index']
  #allocation1 [shape = 'u32[144,128]{1,0:T(1,128)}', space=vmem, size = 0x12000, scoped, tag = 'internal scratch']
  %s0 = inlined_call_operand.hbm [shape: f32[2,24,256], index: 0, kind: input, shape index: {}]
  %s1 = inlined_call_operand.hbm [shape: f32[24,128], index: 1, kind: input, shape index: {}]
  %s2 = inlined_call_operand.vmem [shape: f32[1,128], index: 2, kind: input, shape index: {}]
  %s3 = inlined_call_operand.hbm [shape: f32[2,128], index: 3, kind: output, shape index: {}]
  %s4 = sld [smem:[#allocation0]]
  $region30: #{tpu_custom_call.1} parent=0
    _
  %s6 = ssub.s32 1, %s4
  %s7 = scalar_select 0, %s6, %s4
  $region1: #{tpu_custom_call.1} parent=0
    #allocation2 [shape = 'u8[49152]{0}', space=vmem, size = 0xc000, scoped, tag = 'input window, operand 0, single buffered']
    #allocation3 [shape = 's32[1]{0}', space=sflag, size = 0x4, scoped, tag = 'scoped memory for tpu_custom_call.1']
    #allocation4 [shape = 's32[1]{0}', space=sflag, size = 0x4, scoped, tag = 'scoped memory for tpu_custom_call.1']
    #allocation5 [shape = 'u8[12288]{0}', space=vmem, size = 0x3000, scoped, tag = 'input window, operand 1, single buffered']
    #allocation6 [shape = 's32[1]{0}', space=sflag, size = 0x4, scoped, tag = 'scoped memory for tpu_custom_call.1']
    #allocation7 [shape = 'u8[1024]{0}', space=vmem, size = 0x400, scoped, tag = 'output window, operand 0, single buffered']
    %8 = vsyncpa [#allocation3], 0
    %9 = vsyncpa [#allocation6], 0
    %10 = vsyncpa [#allocation4], 0
    // Predicated region
    $region2: #{tpu_custom_call.1} parent=1 // pred_check
      _
    $region3: #{tpu_custom_call.1} parent=1 // pred_check_branch
      %12 = sbr.rel (0) target = $region5
    $region4: #{tpu_custom_call.1} parent=1 // pred_region
      %s14 = ssub.s32 1536, 1536
      %15 = vsyncadd [#allocation3], %s14
      %s16 = sshll.u32 [#allocation2], 4
      %s17 = int_to_ptr.vmem [resolvable:$true] %s16
      %22 = dma.hbm_to_vmem [thread:$0]  %s0, 1536, %s17, [#allocation3], 256, 256, 16
    $region5: #{tpu_custom_call.1} parent=1 // pred_fallthru
      _
    // Predicated region
    $region6: #{tpu_custom_call.1} parent=1 // pred_check
      _
    $region7: #{tpu_custom_call.1} parent=1 // pred_check_branch
      %24 = sbr.rel (0) target = $region9
    $region8: #{tpu_custom_call.1} parent=1 // pred_region
      %s26 = ssub.s32 384, 384
      %27 = vsyncadd [#allocation6], %s26
      %s28 = sshll.u32 [#allocation5], 4
      %s29 = int_to_ptr.vmem [resolvable:$true] %s28
      %34 = dma.hbm_to_vmem [thread:$0]  %s1, 384, %s29, [#allocation6], 128, 128, 8
    $region9: #{tpu_custom_call.1} parent=1 // pred_fallthru
      _
    // Predicated region
    $region10: #{tpu_custom_call.1} parent=1 // pred_check
      _
    $region11: #{tpu_custom_call.1} parent=1 // pred_check_branch
      %36 = sbr.rel (0) target = $region13
    $region12: #{tpu_custom_call.1} parent=1 // pred_region
      _
    $region13: #{tpu_custom_call.1} parent=1 // pred_fallthru
      _
    // Predicated region
    $region14: #{tpu_custom_call.1} parent=1 // pred_check
      _
    $region15: #{tpu_custom_call.1} parent=1 // pred_check_branch
      %38 = sbr.rel (0) target = $region17
    $region16: #{tpu_custom_call.1} parent=1 // pred_region
      %39 = dma.done [#allocation3], 1536
    $region17: #{tpu_custom_call.1} parent=1 // pred_fallthru
      _
    // Predicated region
    $region18: #{tpu_custom_call.1} parent=1 // pred_check
      _
    $region19: #{tpu_custom_call.1} parent=1 // pred_check_branch
      %41 = sbr.rel (0) target = $region21
    $region20: #{tpu_custom_call.1} parent=1 // pred_region
      %42 = dma.done [#allocation6], 384
    $region21: #{tpu_custom_call.1} parent=1 // pred_fallthru
      _
    %v43 = vld [vmem:[#allocation2] sm:$0xff]
    %v44 = vld [vmem:[#allocation2 + $0x8] sm:$0xff]
    %v45 = vld [vmem:[#allocation2 + $0x10] sm:$0xff]
    %v46 = vld [vmem:[#allocation2 + $0x18] sm:$0xff]
    %v47 = vld [vmem:[#allocation2 + $0x20] sm:$0xff]
    %v48 = vld [vmem:[#allocation2 + $0x28] sm:$0xff]
    %v49 = vld [vmem:[#allocation2 + $0x30] sm:$0xff]
    %v50 = vld [vmem:[#allocation2 + $0x38] sm:$0xff]
    %v51 = vld [vmem:[#allocation2 + $0x40] sm:$0xff]
    %v52 = vld [vmem:[#allocation2 + $0x48] sm:$0xff]
    %v53 = vld [vmem:[#allocation2 + $0x50] sm:$0xff]
    %v54 = vld [vmem:[#allocation2 + $0x58] sm:$0xff]
    %v55 = vadd.f32 %v43, %v44
    %56 = vadd.xlane.f32.xlu0 %v55
    %v57 = vpop.xlane.xlu0 %56
    %v58 = vadd.f32 %v45, %v46
    %59 = vadd.xlane.f32.xlu0 %v58
    %v60 = vpop.xlane.xlu0 %59
    %v61 = vadd.f32 %v47, %v48
    %62 = vadd.xlane.f32.xlu0 %v61
    %v63 = vpop.xlane.xlu0 %62
    %v64 = vadd.f32 %v49, %v50
    %65 = vadd.xlane.f32.xlu0 %v64
    %v66 = vpop.xlane.xlu0 %65
    %v67 = vadd.f32 %v51, %v52
    %68 = vadd.xlane.f32.xlu0 %v67
    %v69 = vpop.xlane.xlu0 %68
    %v70 = vadd.f32 %v53, %v54
    %71 = vadd.xlane.f32.xlu0 %v70
    %v72 = vpop.xlane.xlu0 %71
    %v73 = vld [vmem:[#allocation5] sm:$0xff]
    %v74 = vld [vmem:[#allocation5 + $0x8] sm:$0xff]
    %v75 = vld [vmem:[#allocation5 + $0x10] sm:$0xff]
    %v76 = vld [vmem:[%s2] sm:$0x1]
    %v78 = vlaneseq
    %v79 = vshrl.u32 %v78, 7
    %v80 = vsub.s32 0, %v79
    %v81 = vrot.slane %v76, %v80
    %v89 = vlaneseq
    %v90 = vand.u32 %v89, 127
    %v91 = vlaneseq
    %v92 = vshrl.u32 %v91, 7
    %v93 = vsub.s32 %v90, %v92
    %v94 = vrot.slane %v57, %v93
    %v95 = vadd.s32 %v90, 4294967288
    %v96 = vlaneseq
    %v97 = vshrl.u32 %v96, 7
    %v98 = vsub.s32 %v95, %v97
    %v99 = vrot.slane %v60, %v98
    %vm100 = vcmask 130112
    %v101 = vsel %vm100, %v99, %v94
    %v102 = vadd.s32 %v90, 4294967280
    %v103 = vlaneseq
    %v104 = vshrl.u32 %v103, 7
    %v105 = vsub.s32 %v102, %v104
    %v106 = vrot.slane %v63, %v105
    %vm107 = vcmask 195712
    %v108 = vsel %vm107, %v106, %v101
    %v109 = vlaneseq
    %v110 = vshrl.u32 %v109, 7
    %v111 = vsub.s32 %v90, %v110
    %v112 = vrot.slane %v66, %v111
    %v113 = vlaneseq
    %v114 = vshrl.u32 %v113, 7
    %v115 = vsub.s32 %v95, %v114
    %v116 = vrot.slane %v69, %v115
    %v117 = vsel %vm100, %v116, %v112
    %v118 = vlaneseq
    %v119 = vshrl.u32 %v118, 7
    %v120 = vsub.s32 %v102, %v119
    %v121 = vrot.slane %v72, %v120
    %v122 = vsel %vm107, %v121, %v117
    %vm123 = vcmask 1041409
    %v124 = vsel %vm123, %v122, %v108
    %vm125 = vcmask 195584
    %v126 = vsel %vm125, %v124, 0
    %128 = vmatprep.subr.mxu0 0.0
    %129 = vmatpush1.msra.mxu0 %v73
    %130 = vmatprep.subr.mxu0 0.0
    %131 = vmatpush1.msra.mxu0 %v74
    %132 = vmatprep.subr.mxu0 0.0
    %133 = vmatpush1.msra.mxu0 %v75
    %134 = vmatprep.subr.mxu0 0.0
    %135 = vmatpush1.msra.mxu0 0.0
    %136 = vmatprep.subr.mxu0 0.0
    %137 = vmatpush1.msra.mxu0 0.0
    %138 = vmatprep.subr.mxu0 0.0
    %139 = vmatpush1.msra.mxu0 0.0
    %140 = vmatprep.subr.mxu0 0.0
    %141 = vmatpush1.msra.mxu0 0.0
    %142 = vmatprep.subr.mxu0 0.0
    %143 = vmatpush1.msra.mxu0 0.0
    %144 = vmatprep.subr.mxu0 0.0
    %145 = vmatpush1.msra.mxu0 0.0
    %146 = vmatprep.subr.mxu0 0.0
    %147 = vmatpush1.msra.mxu0 0.0
    %148 = vmatprep.subr.mxu0 0.0
    %149 = vmatpush1.msra.mxu0 0.0
    %150 = vmatprep.subr.mxu0 0.0
    %151 = vmatpush1.msra.mxu0 0.0
    %152 = vmatprep.subr.mxu0 0.0
    %153 = vmatpush1.msra.mxu0 0.0
    %154 = vmatprep.subr.mxu0 0.0
    %155 = vmatpush1.msra.mxu0 0.0
    %156 = vmatprep.subr.mxu0 0.0
    %157 = vmatpush1.msra.mxu0 0.0
    %158 = vmatprep.subr.mxu0 0.0
    %159 = vmatpush1.msra.mxu0 0.0
    %160 = vmatprep.subr.mxu0 0.0
    %161 = vmatpush1.msra.mxu0 0.0
    %162 = vmatprep.subr.mxu0 0.0
    %163 = vmatpush1.msra.mxu0 0.0
    %164 = vmatprep.subr.mxu0 0.0
    %165 = vmatpush1.msra.mxu0 0.0
    %166 = vmatprep.subr.mxu0 0.0
    %167 = vmatpush1.msra.mxu0 0.0
    %168 = vmatprep.subr.mxu0 0.0
    %169 = vmatpush1.msra.mxu0 0.0
    %170 = vmatprep.subr.mxu0 0.0
    %171 = vmatpush1.msra.mxu0 0.0
    %172 = vmatprep.subr.mxu0 0.0
    %173 = vmatpush1.msra.mxu0 0.0
    %174 = vmatprep.subr.mxu0 0.0
    %175 = vmatpush1.msra.mxu0 0.0
    %176 = vmatprep.subr.mxu0 0.0
    %177 = vmatpush1.msra.mxu0 0.0
    %178 = vmatprep.subr.mxu0 0.0
    %179 = vmatpush1.msra.mxu0 0.0
    %180 = vmatprep.subr.mxu0 0.0
    %181 = vmatpush1.msra.mxu0 0.0
    %182 = vmatprep.subr.mxu0 0.0
    %183 = vmatpush1.msra.mxu0 0.0
    %184 = vmatprep.subr.mxu0 0.0
    %185 = vmatpush1.msra.mxu0 0.0
    %186 = vmatprep.subr.mxu0 0.0
    %187 = vmatpush1.msra.mxu0 0.0
    %188 = vmatprep.subr.mxu0 0.0
    %189 = vmatpush1.msra.mxu0 0.0
    %190 = vmatprep.subr.mxu0 0.0
    %191 = vmatpush1.msra.mxu0 0.0
    %192 = vmatprep.mubr.f32.mxu0 0.0
    %193 = vmatmul.mubr.f32.gmra.mrb[0].mxu0 %v126
    %v194 = vpop.f32.mrb[0].mxu0
    %v195 = vadd.f32 %v81, %v194
    %v196 = vpop.f32.mrb[0].mxu0
    %197 = vdwg.mxu0
    %198 = vst [vmem:[#allocation7] sm:$0x3] %v195
    // Predicated region
    $region22: #{tpu_custom_call.1} parent=1 // pred_check
      _
    $region23: #{tpu_custom_call.1} parent=1 // pred_check_branch
      %200 = sbr.rel (0) target = $region25
    $region24: #{tpu_custom_call.1} parent=1 // pred_region
      %s202 = ssub.s32 32, 32
      %203 = vsyncadd [#allocation4], %s202
      %s205 = sshll.u32 [#allocation7], 4
      %s206 = int_to_ptr.vmem [resolvable:$true] %s205
      %208 = dma.vmem_to_hbm [thread:$0]  %s206, 32, %s3, [#allocation4]
    $region25: #{tpu_custom_call.1} parent=1 // pred_fallthru
      _
    // Predicated region
    $region26: #{tpu_custom_call.1} parent=1 // pred_check
      _
    $region27: #{tpu_custom_call.1} parent=1 // pred_check_branch
      %210 = sbr.rel (0) target = $region29
    $region28: #{tpu_custom_call.1} parent=1 // pred_region
      %211 = dma.done [#allocation4], 32
    $region29: #{tpu_custom_call.1} parent=1 // pred_fallthru
      _
    %212 = vsyncpa [#allocation3], 1
    %213 = vsyncpa [#allocation6], 1
    %214 = vsyncpa [#allocation4], 1

</llo_original>
